<compile_context>
chip_gen: v6e
topology: v6e:2x2x1
jax: 0.10.0
libtpu: 0.0.40
codegen_flags: <defaults>
</compile_context>

<pallas_src>
import math

import jax
import jax.numpy as jnp
from jax.experimental import pallas as pl
from jax.experimental.pallas import tpu as pltpu


def _pad_kernel(x_ref, o_ref):
    # x_ref: (row_tile, H, W) block; o_ref: (row_tile, S, S) block.
    _, h, w = x_ref.shape
    o_ref[...] = jnp.zeros_like(o_ref)
    o_ref[:, :h, :w] = x_ref[...]


def pad_to_size(image: jax.Array, size: int) -> jax.Array:
    """Equivalent of PadToSize(size)(image): zero-pad the last two dims to (size, size)."""
    *lead, h, w = image.shape
    assert size >= h and size >= w, "PadToSize expects size >= spatial dims"

    rows = math.prod(lead) if lead else 1
    x = image.reshape(rows, h, w)

    itemsize = jnp.dtype(image.dtype).itemsize
    # VMEM held per block row: input + output, double-buffered by the pipeline.
    bytes_per_row = 2 * (h * w + size * size) * itemsize
    # Conservative in-flight budget that fits every generation's scoped VMEM
    # (v5e default 16 MiB, v7x 32 MiB of 64 MiB physical).
    vmem_budget = 12 * 1024 * 1024
    row_tile = max(1, min(rows, vmem_budget // bytes_per_row))

    grid = (pl.cdiv(rows, row_tile),)

    cost = pl.CostEstimate(
        flops=0,
        transcendentals=0,
        bytes_accessed=(rows * h * w + rows * size * size) * itemsize,
    )

    out = pl.pallas_call(
        _pad_kernel,
        out_shape=jax.ShapeDtypeStruct((rows, size, size), image.dtype),
        grid=grid,
        in_specs=[pl.BlockSpec((row_tile, h, w), lambda i: (i, 0, 0))],
        out_specs=pl.BlockSpec((row_tile, size, size), lambda i: (i, 0, 0)),
        compiler_params=pltpu.CompilerParams(
            dimension_semantics=("parallel",),
            vmem_limit_bytes=32 * 1024 * 1024,
        ),
        cost_estimate=cost,
    )(x)

    return out.reshape(*lead, size, size)


if __name__ == "__main__":
    key = jax.random.PRNGKey(0)
    B, C, H, W = 2, 4, 16, 16
    SIZE = 24

    x = jax.random.normal(key, (B, C, H, W), dtype=jnp.float32)

    out = jax.block_until_ready(pad_to_size(x, SIZE))

    # Reference: right/bottom zero padding (matches F.pad(image, (0, padw, 0, padh))).
    ref = jnp.pad(x, ((0, 0), (0, 0), (0, SIZE - H), (0, SIZE - W)))
    assert out.shape == (B, C, SIZE, SIZE)
    assert out.dtype == x.dtype
    assert jnp.array_equal(out, ref)

    print("KERNEL_OK")
</pallas_src>

<mosaic_0001>
module attributes {stable_mosaic.version = 11 : i64} {
  func.func @_pad_kernel(%arg0: i32, %arg1: memref<8x16x16xf32, #tpu.memory_space<vmem>>, %arg2: memref<8x24x24xf32, #tpu.memory_space<vmem>>) attributes {dimension_semantics = [#tpu.dimension_semantics<parallel>], iteration_bounds = array<i64: 1>, scalar_prefetch = 0 : i64, scratch_operands = 0 : i64, tpu.core_type = #tpu.core_type<tc>, window_params = [{transform_indices = @transform_0, window_bounds = array<i64: 8, 16, 16>}, {transform_indices = @transform_1, window_bounds = array<i64: 8, 24, 24>}]} {
    %cst = arith.constant 0.000000e+00 : f32
    %0 = vector.broadcast %cst : f32 to vector<8x24x24xf32>
    %c0 = arith.constant 0 : index
    %c0_0 = arith.constant 0 : index
    %c0_1 = arith.constant 0 : index
    %1 = vector.load %arg2[%c0, %c0_0, %c0_1] : memref<8x24x24xf32, #tpu.memory_space<vmem>>, vector<8x24x24xf32>
    tpu.vector_store %arg2[%c0, %c0_0, %c0_1], %0 {strides = array<i32>} : memref<8x24x24xf32, #tpu.memory_space<vmem>>, vector<8x24x24xf32>,
    %c0_2 = arith.constant 0 : index
    %c0_3 = arith.constant 0 : index
    %c0_4 = arith.constant 0 : index
    %2 = vector.load %arg1[%c0_2, %c0_3, %c0_4] : memref<8x16x16xf32, #tpu.memory_space<vmem>>, vector<8x16x16xf32>
    %c0_5 = arith.constant 0 : index
    %c0_6 = arith.constant 0 : index
    %c0_7 = arith.constant 0 : index
    %3 = vector.load %arg2[%c0_5, %c0_6, %c0_7] : memref<8x24x24xf32, #tpu.memory_space<vmem>>, vector<8x16x16xf32>
    tpu.vector_store %arg2[%c0_5, %c0_6, %c0_7], %2 {strides = array<i32>} : memref<8x24x24xf32, #tpu.memory_space<vmem>>, vector<8x16x16xf32>,
    return
  }
  func.func @transform_0(%arg0: i32) -> (i32, i32, i32) {
    %c0_i32 = arith.constant 0 : i32
    %c0_i32_0 = arith.constant 0 : i32
    %c0_i32_1 = arith.constant 0 : i32
    return %arg0, %c0_i32, %c0_i32_0 : i32, i32, i32
  }
  func.func @transform_1(%arg0: i32) -> (i32, i32, i32) {
    %c0_i32 = arith.constant 0 : i32
    %c0_i32_0 = arith.constant 0 : i32
    %c0_i32_1 = arith.constant 0 : i32
    return %arg0, %c0_i32, %c0_i32_0 : i32, i32, i32
  }
}

</mosaic_0001>

<llo_original>
// kernel: tpu_custom_call.1
$region0: #{tpu_custom_call.1}
  #allocation0 [shape = 'u32[]', space=smem, size = 0x4, offset = 0x4, fixed_abs, tag = 'smem constant byte address 0x4 - core index']
  #allocation1 [shape = 'u32[144,128]{1,0:T(1,128)}', space=vmem, size = 0x12000, scoped, tag = 'internal scratch']
  %s0 = inlined_call_operand.hbm [shape: f32[8,16,16], index: 0, kind: input, shape index: {}]
  %s1 = inlined_call_operand.hbm [shape: f32[8,24,24], index: 1, kind: output, shape index: {}]
  %s2 = sld [smem:[#allocation0]]
  $region18: #{tpu_custom_call.1} parent=0
    _
  %s4 = ssub.s32 1, %s2
  %s5 = scalar_select 0, %s4, %s2
  $region1: #{tpu_custom_call.1} parent=0
    #allocation2 [shape = 'u8[65536]{0}', space=vmem, size = 0x10000, scoped, tag = 'input window, operand 0, single buffered']
    #allocation3 [shape = 's32[1]{0}', space=sflag, size = 0x4, scoped, tag = 'scoped memory for tpu_custom_call.1']
    #allocation4 [shape = 's32[1]{0}', space=sflag, size = 0x4, scoped, tag = 'scoped memory for tpu_custom_call.1']
    #allocation5 [shape = 'u8[98304]{0}', space=vmem, size = 0x18000, scoped, tag = 'output window, operand 0, single buffered']
    %6 = vsyncpa [#allocation3], 0
    %7 = vsyncpa [#allocation4], 0
    // Predicated region
    $region2: #{tpu_custom_call.1} parent=1 // pred_check
      _
    $region3: #{tpu_custom_call.1} parent=1 // pred_check_branch
      %9 = sbr.rel (0) target = $region5
    $region4: #{tpu_custom_call.1} parent=1 // pred_region
      %s11 = ssub.s32 2048, 2048
      %12 = vsyncadd [#allocation3], %s11
      %s13 = sshll.u32 [#allocation2], 4
      %s14 = int_to_ptr.vmem [resolvable:$true] %s13
      %19 = dma.hbm_to_vmem [thread:$0]  %s0, 2048, %s14, [#allocation3], 128, 128, 8
    $region5: #{tpu_custom_call.1} parent=1 // pred_fallthru
      _
    // Predicated region
    $region6: #{tpu_custom_call.1} parent=1 // pred_check
      _
    $region7: #{tpu_custom_call.1} parent=1 // pred_check_branch
      %21 = sbr.rel (0) target = $region9
    $region8: #{tpu_custom_call.1} parent=1 // pred_region
      %22 = dma.done [#allocation3], 2048
    $region9: #{tpu_custom_call.1} parent=1 // pred_fallthru
      _
    %vm23 = vcmask 195584
    %24 = vst.msk [vmem:[#allocation5] sm:$0xff] %vm23, 0.0
    %25 = vst.msk [vmem:[#allocation5 + $0x8] sm:$0xff] %vm23, 0.0
    %26 = vst.msk [vmem:[#allocation5 + $0x10] sm:$0xff] %vm23, 0.0
    %27 = vst.msk [vmem:[#allocation5 + $0x18] sm:$0xff] %vm23, 0.0
    %28 = vst.msk [vmem:[#allocation5 + $0x20] sm:$0xff] %vm23, 0.0
    %29 = vst.msk [vmem:[#allocation5 + $0x28] sm:$0xff] %vm23, 0.0
    %30 = vst.msk [vmem:[#allocation5 + $0x30] sm:$0xff] %vm23, 0.0
    %31 = vst.msk [vmem:[#allocation5 + $0x38] sm:$0xff] %vm23, 0.0
    %32 = vst.msk [vmem:[#allocation5 + $0x40] sm:$0xff] %vm23, 0.0
    %33 = vst.msk [vmem:[#allocation5 + $0x48] sm:$0xff] %vm23, 0.0
    %34 = vst.msk [vmem:[#allocation5 + $0x50] sm:$0xff] %vm23, 0.0
    %35 = vst.msk [vmem:[#allocation5 + $0x58] sm:$0xff] %vm23, 0.0
    %36 = vst.msk [vmem:[#allocation5 + $0x60] sm:$0xff] %vm23, 0.0
    %37 = vst.msk [vmem:[#allocation5 + $0x68] sm:$0xff] %vm23, 0.0
    %38 = vst.msk [vmem:[#allocation5 + $0x70] sm:$0xff] %vm23, 0.0
    %39 = vst.msk [vmem:[#allocation5 + $0x78] sm:$0xff] %vm23, 0.0
    %40 = vst.msk [vmem:[#allocation5 + $0x80] sm:$0xff] %vm23, 0.0
    %41 = vst.msk [vmem:[#allocation5 + $0x88] sm:$0xff] %vm23, 0.0
    %42 = vst.msk [vmem:[#allocation5 + $0x90] sm:$0xff] %vm23, 0.0
    %43 = vst.msk [vmem:[#allocation5 + $0x98] sm:$0xff] %vm23, 0.0
    %44 = vst.msk [vmem:[#allocation5 + $0xa0] sm:$0xff] %vm23, 0.0
    %45 = vst.msk [vmem:[#allocation5 + $0xa8] sm:$0xff] %vm23, 0.0
    %46 = vst.msk [vmem:[#allocation5 + $0xb0] sm:$0xff] %vm23, 0.0
    %47 = vst.msk [vmem:[#allocation5 + $0xb8] sm:$0xff] %vm23, 0.0
    %v48 = vld [vmem:[#allocation2] sm:$0xff]
    %v49 = vld [vmem:[#allocation2 + $0x8] sm:$0xff]
    %v50 = vld [vmem:[#allocation2 + $0x10] sm:$0xff]
    %v51 = vld [vmem:[#allocation2 + $0x18] sm:$0xff]
    %v52 = vld [vmem:[#allocation2 + $0x20] sm:$0xff]
    %v53 = vld [vmem:[#allocation2 + $0x28] sm:$0xff]
    %v54 = vld [vmem:[#allocation2 + $0x30] sm:$0xff]
    %v55 = vld [vmem:[#allocation2 + $0x38] sm:$0xff]
    %v56 = vld [vmem:[#allocation2 + $0x40] sm:$0xff]
    %v57 = vld [vmem:[#allocation2 + $0x48] sm:$0xff]
    %v58 = vld [vmem:[#allocation2 + $0x50] sm:$0xff]
    %v59 = vld [vmem:[#allocation2 + $0x58] sm:$0xff]
    %v60 = vld [vmem:[#allocation2 + $0x60] sm:$0xff]
    %v61 = vld [vmem:[#allocation2 + $0x68] sm:$0xff]
    %v62 = vld [vmem:[#allocation2 + $0x70] sm:$0xff]
    %v63 = vld [vmem:[#allocation2 + $0x78] sm:$0xff]
    %vm64 = vcmask 130048
    %65 = vst.msk [vmem:[#allocation5] sm:$0xff] %vm64, %v48
    %66 = vst.msk [vmem:[#allocation5 + $0x8] sm:$0xff] %vm64, %v49
    %67 = vst.msk [vmem:[#allocation5 + $0x18] sm:$0xff] %vm64, %v50
    %68 = vst.msk [vmem:[#allocation5 + $0x20] sm:$0xff] %vm64, %v51
    %69 = vst.msk [vmem:[#allocation5 + $0x30] sm:$0xff] %vm64, %v52
    %70 = vst.msk [vmem:[#allocation5 + $0x38] sm:$0xff] %vm64, %v53
    %71 = vst.msk [vmem:[#allocation5 + $0x48] sm:$0xff] %vm64, %v54
    %72 = vst.msk [vmem:[#allocation5 + $0x50] sm:$0xff] %vm64, %v55
    %73 = vst.msk [vmem:[#allocation5 + $0x60] sm:$0xff] %vm64, %v56
    %74 = vst.msk [vmem:[#allocation5 + $0x68] sm:$0xff] %vm64, %v57
    %75 = vst.msk [vmem:[#allocation5 + $0x78] sm:$0xff] %vm64, %v58
    %76 = vst.msk [vmem:[#allocation5 + $0x80] sm:$0xff] %vm64, %v59
    %77 = vst.msk [vmem:[#allocation5 + $0x90] sm:$0xff] %vm64, %v60
    %78 = vst.msk [vmem:[#allocation5 + $0x98] sm:$0xff] %vm64, %v61
    %79 = vst.msk [vmem:[#allocation5 + $0xa8] sm:$0xff] %vm64, %v62
    %80 = vst.msk [vmem:[#allocation5 + $0xb0] sm:$0xff] %vm64, %v63
    // Predicated region
    $region10: #{tpu_custom_call.1} parent=1 // pred_check
      _
    $region11: #{tpu_custom_call.1} parent=1 // pred_check_branch
      %82 = sbr.rel (0) target = $region13
    $region12: #{tpu_custom_call.1} parent=1 // pred_region
      %s84 = ssub.s32 3072, 3072
      %85 = vsyncadd [#allocation4], %s84
      %s86 = sshll.u32 [#allocation5], 4
      %s87 = int_to_ptr.vmem [resolvable:$true] %s86
      %92 = dma.vmem_to_hbm [thread:$0]  %s87, 3072, %s1, [#allocation4], 128, 128, 8
    $region13: #{tpu_custom_call.1} parent=1 // pred_fallthru
      _
    // Predicated region
    $region14: #{tpu_custom_call.1} parent=1 // pred_check
      _
    $region15: #{tpu_custom_call.1} parent=1 // pred_check_branch
      %94 = sbr.rel (0) target = $region17
    $region16: #{tpu_custom_call.1} parent=1 // pred_region
      %95 = dma.done [#allocation4], 3072
    $region17: #{tpu_custom_call.1} parent=1 // pred_fallthru
      _
    %96 = vsyncpa [#allocation3], 1
    %97 = vsyncpa [#allocation4], 1

</llo_original>
